<compile_context>
chip_gen: v5e
topology: v5e:2x2
jax: 0.10.0
libtpu: 0.0.40
codegen_flags: <defaults>
</compile_context>

<pallas_src>
import math

import jax
import jax.numpy as jnp
from jax.experimental import pallas as pl
from jax.experimental.pallas import tpu as pltpu


# --------------------------------------------------------------------------
# Kernel
# --------------------------------------------------------------------------
def linear_time_kernel(x_ref, w_ref, b_ref, out_ref):
    # x_ref:   (Cp, Lb)        zero-padded channels x flattened (b, h, t) lanes
    # w_ref:   (c_out, Kt*Cp)  taps packed along the contraction axis (resident)
    # b_ref:   (c_out, 1)      bias, f32 (resident)
    # out_ref: (c_out, Lb)     lane-dense output slab; lanes with
    #                          (l mod W) >= T_out are garbage and are sliced
    #                          away in the wrapper.
    Cp, Lb = x_ref.shape
    Kt = w_ref.shape[1] // Cp

    x = x_ref[...]
    # Tap k realized as a lane roll (XLU slot, essentially free):
    #   x_k[:, l] = x[:, l + k].  Wrap-around only contaminates lanes with
    #   (l mod W) >= T_out, which the wrapper slices away (Lb % W == 0).
    taps = [x]
    for k in range(1, Kt):
        taps.append(pltpu.roll(x, shift=(Lb - k) % Lb, axis=1))
    xs = jnp.concatenate(taps, axis=0) if Kt > 1 else x        # (Kt*Cp, Lb)

    # Single MXU matmul over the fused (tap, channel) contraction axis,
    # f32 accumulation regardless of input dtype.
    acc = jnp.dot(w_ref[...], xs, preferred_element_type=jnp.float32)
    out_ref[...] = (acc + b_ref[...]).astype(out_ref.dtype)


# --------------------------------------------------------------------------
# Block-size selection (generation-aware)
# --------------------------------------------------------------------------
def _round_up(a, b):
    return -(-a // b) * b


def _tpu_vmem_bytes():
    """Physical VMEM per TensorCore; conservative fallback if the query fails."""
    try:
        return int(pltpu.get_tpu_info().vmem_capacity_bytes)
    except Exception:
        return 64 * 1024 * 1024          # assume v7x-sized VMEM if unknown


def _max_lanes(Cp, c_out, in_itemsize, out_itemsize, Kt, vmem_limit):
    """Largest lane-block that keeps double-buffered I/O + in-kernel temps
    (rolled copies, sublane-concat, f32 accumulator) inside ~half the scoped
    VMEM limit."""
    cpad = _round_up(Cp, 8)
    opad = _round_up(c_out, 8)
    bytes_per_lane = ((2 + Kt + (Kt - 1)) * cpad * in_itemsize     # x bufs + taps + concat
                      + (2 * out_itemsize + 4) * opad)             # out bufs + f32 acc
    budget = vmem_limit // 2                                       # headroom for compiler temps
    lanes = budget // max(bytes_per_lane, 1)
    return int(max(2048, min(lanes, 128 * 1024)))


def _choose_group_block(G, W, max_lanes):
    """Pick (Gb, n_blocks) with Lb = Gb*W a multiple of 128 (lane-dense,
    unmasked stores), Lb <= max_lanes, and >= 2 grid steps whenever splitting
    costs no extra padding (keeps both v7x TensorCores busy).  The caller pads
    G up to n_blocks*Gb with whole-W zero groups."""
    g = 128 // math.gcd(W, 128)                       # minimum group granularity
    gb_cap = max(g, (max_lanes // (g * W)) * g)       # largest budget-fitting Gb
    n_blocks = -(-G // gb_cap)
    if n_blocks < 2 and G > g:
        n_blocks = 2
    Gb = -(-G // n_blocks)                            # balance groups per block
    Gb = min(_round_up(Gb, g), gb_cap)
    n_blocks = -(-G // Gb)
    return Gb, n_blocks


# --------------------------------------------------------------------------
# Wrapper
# --------------------------------------------------------------------------
def linear_time_forward(x, weight, bias, *, compute_dtype=None, out_dtype=None):
    """x: (B, c_in, H, W); weight: (c_out, c_in, 1, Kt); bias: (c_out,).
    Returns (B, c_out, H, W - Kt + 1).

    compute_dtype: dtype for x/weight inside the kernel (e.g. jnp.bfloat16
        halves input DMA; MXU still accumulates in f32).  Default: x.dtype.
    out_dtype: output dtype (bf16 saves the larger half of HBM traffic when
        c_out > c_in).  Default: x.dtype.
    """
    B, C, H, W = x.shape
    c_out, c_in, kh, Kt = weight.shape
    assert c_in == C and kh == 1 and 1 <= Kt <= W

    compute_dtype = jnp.dtype(compute_dtype if compute_dtype is not None else x.dtype)
    out_dtype = jnp.dtype(out_dtype if out_dtype is not None else x.dtype)

    T_out = W - Kt + 1
    G = B * H

    # Pad channels so the per-tap sublane concat in the kernel is vreg-aligned
    # (sub-32-bit dtypes pack along sublanes).
    sub = 8 * max(1, 4 // compute_dtype.itemsize)
    Cp = _round_up(C, sub)

    # Generation-aware VMEM budget: ~48 MiB scoped limit on v7x (64 MiB VMEM),
    # up to 96 MiB on v5e/v6e (128 MiB VMEM).
    vmem_limit = int(min(_tpu_vmem_bytes() * 3 // 4, 96 * 1024 * 1024))
    max_lanes = _max_lanes(Cp, c_out, compute_dtype.itemsize, out_dtype.itemsize,
                           Kt, vmem_limit)

    Gb, n_blocks = _choose_group_block(G, W, max_lanes)
    Lb = Gb * W
    assert Lb % W == 0 and Lb % 128 == 0, (Lb, W)     # roll-wrap safety + lane-dense
    G_pad = Gb * n_blocks
    L_pad = G_pad * W

    # Layout plumbing (one XLA pass outside the kernel):
    #   x -> (Cp, G_pad*W) channel-major slab, zero-padded in whole-W groups
    #   w -> (c_out, Kt*Cp) with column index k*Cp + c
    #   b -> (c_out, 1)
    # TODO(synk): keep activations in this channel-major flattened layout
    # between adjacent layers (or fuse the transpose into a neighbour); for a
    # memory-bound op these wrapper transposes dominate end-to-end HBM traffic.
    xg = jnp.transpose(x, (1, 0, 2, 3)).reshape(C, G, W)
    xg = jnp.pad(xg, ((0, Cp - C), (0, G_pad - G), (0, 0)))
    xr = xg.reshape(Cp, L_pad).astype(compute_dtype)

    w3 = jnp.transpose(weight[:, :, 0, :], (0, 2, 1))            # (c_out, Kt, C)
    w3 = jnp.pad(w3, ((0, 0), (0, 0), (0, Cp - C)))
    wr = w3.reshape(c_out, Kt * Cp).astype(compute_dtype)
    br = bias.reshape(c_out, 1).astype(jnp.float32)

    out_flat = pl.pallas_call(
        linear_time_kernel,
        out_shape=jax.ShapeDtypeStruct((c_out, L_pad), out_dtype),
        grid_spec=pltpu.PrefetchScalarGridSpec(
            num_scalar_prefetch=0,
            grid=(n_blocks,),
            in_specs=[
                # x slab tile; add pipeline_mode=pl.Buffered(3) only if a trace
                # shows exposed input DMA (costs VMEM, scarce on v7x).
                pl.BlockSpec((Cp, Lb), lambda i: (0, i)),
                pl.BlockSpec((c_out, Kt * Cp), lambda i: (0, 0)),   # weights (resident)
                pl.BlockSpec((c_out, 1), lambda i: (0, 0)),         # bias (resident)
            ],
            out_specs=pl.BlockSpec((c_out, Lb), lambda i: (0, i)),
        ),
        compiler_params=pltpu.CompilerParams(
            dimension_semantics=("parallel",),
            vmem_limit_bytes=vmem_limit,
        ),
    )(xr, wr, br)

    # Undo lane flattening: keep real groups and the T_out valid time positions,
    # return to PyTorch NCHW order.
    y = out_flat.reshape(c_out, G_pad, W)[:, :G, :T_out].reshape(c_out, B, H, T_out)
    return jnp.transpose(y, (1, 0, 2, 3))


def linear_time_reference(x, weight, bias):
    # Pure-JAX reference with exact PyTorch Conv2d semantics.
    y = jax.lax.conv_general_dilated(
        x, weight, window_strides=(1, 1), padding="VALID",
        dimension_numbers=("NCHW", "OIHW", "NCHW"))
    return y + bias[None, :, None, None]


if __name__ == "__main__":
    # Small shapes consistent with linear_time(c_in, c_out, Kt):
    # x is (batch, c_in, num_nodes, time).
    B, c_in, c_out, H, W, Kt = 2, 4, 8, 16, 16, 3

    key = jax.random.PRNGKey(0)
    k_x, k_w, k_b = jax.random.split(key, 3)

    x = jax.random.normal(k_x, (B, c_in, H, W), dtype=jnp.float32)
    weight = jax.random.normal(k_w, (c_out, c_in, 1, Kt), dtype=jnp.float32) / jnp.sqrt(c_in * Kt)
    bias = jax.random.normal(k_b, (c_out,), dtype=jnp.float32) * 0.1

    ref = linear_time_reference(x, weight, bias)

    # Default f32 path (exact tolerance).
    out = jax.block_until_ready(linear_time_forward(x, weight, bias))
    assert out.shape == (B, c_out, H, W - Kt + 1)
    assert jnp.allclose(out, ref, atol=1e-3, rtol=1e-3), "f32 mismatch vs reference"

    # Bandwidth-saving bf16 I/O path (f32 MXU accumulation) — looser tolerance.
    out_bf16 = jax.block_until_ready(
        linear_time_forward(x, weight, bias,
                            compute_dtype=jnp.bfloat16, out_dtype=jnp.bfloat16))
    assert jnp.allclose(out_bf16.astype(jnp.float32), ref, atol=1e-1, rtol=1e-1), \
        "bf16 mismatch vs reference"

    print("KERNEL_OK")
</pallas_src>

<mosaic_0001>
module attributes {stable_mosaic.version = 11 : i64} {
  func.func @linear_time_kernel(%arg0: i32, %arg1: memref<8x256xf32, #tpu.memory_space<vmem>>, %arg2: memref<8x24xf32, #tpu.memory_space<vmem>>, %arg3: memref<8x1xf32, #tpu.memory_space<vmem>>, %arg4: memref<8x256xf32, #tpu.memory_space<vmem>>) attributes {dimension_semantics = [#tpu.dimension_semantics<parallel>], iteration_bounds = array<i64: 2>, scalar_prefetch = 0 : i64, scratch_operands = 0 : i64, tpu.core_type = #tpu.core_type<tc>, window_params = [{transform_indices = @transform_0, window_bounds = array<i64: 8, 256>}, {pipeline_mode = #tpu.pipeline_mode<synchronous>, transform_indices = @transform_1, window_bounds = array<i64: 8, 24>}, {pipeline_mode = #tpu.pipeline_mode<synchronous>, transform_indices = @transform_2, window_bounds = array<i64: 8, 1>}, {transform_indices = @transform_3, window_bounds = array<i64: 8, 256>}]} {
    %c0 = arith.constant 0 : index
    %c0_0 = arith.constant 0 : index
    %0 = vector.load %arg1[%c0, %c0_0] : memref<8x256xf32, #tpu.memory_space<vmem>>, vector<8x256xf32>
    %c255_i32 = arith.constant 255 : i32
    %1 = tpu.dynamic_rotate %0 by %c255_i32 dim 1 : vector<8x256xf32>, i32 -> vector<8x256xf32>
    %c254_i32 = arith.constant 254 : i32
    %2 = tpu.dynamic_rotate %0 by %c254_i32 dim 1 : vector<8x256xf32>, i32 -> vector<8x256xf32>
    %3 = tpu.concatenate %0, %1, %2 in 0 : vector<8x256xf32>, vector<8x256xf32>, vector<8x256xf32> -> vector<24x256xf32>
    %c0_1 = arith.constant 0 : index
    %c0_2 = arith.constant 0 : index
    %4 = vector.load %arg2[%c0_1, %c0_2] : memref<8x24xf32, #tpu.memory_space<vmem>>, vector<8x24xf32>
    %cst = arith.constant dense<0.000000e+00> : vector<8x256xf32>
    %5 = tpu.matmul %4, %3, %cst {dimension_numbers = #tpu.dot_dimension_numbers<[1], [0], [0], [1], [0, 0, 1, 1], [], []>} : vector<8x24xf32>, vector<24x256xf32>, vector<8x256xf32> -> vector<8x256xf32>
    %c0_3 = arith.constant 0 : index
    %c0_4 = arith.constant 0 : index
    %6 = vector.load %arg3[%c0_3, %c0_4] : memref<8x1xf32, #tpu.memory_space<vmem>>, vector<8x1xf32>
    %7 = vector.broadcast %6 : vector<8x1xf32> to vector<8x256xf32>
    %8 = arith.addf %5, %7 : vector<8x256xf32>
    %c0_5 = arith.constant 0 : index
    %c0_6 = arith.constant 0 : index
    %9 = vector.load %arg4[%c0_5, %c0_6] : memref<8x256xf32, #tpu.memory_space<vmem>>, vector<8x256xf32>
    tpu.vector_store %arg4[%c0_5, %c0_6], %8 {strides = array<i32>} : memref<8x256xf32, #tpu.memory_space<vmem>>, vector<8x256xf32>,
    return
  }
  func.func @transform_0(%arg0: i32) -> (i32, i32) {
    %c0_i32 = arith.constant 0 : i32
    %c0_i32_0 = arith.constant 0 : i32
    return %c0_i32, %arg0 : i32, i32
  }
  func.func @transform_1(%arg0: i32) -> (i32, i32) {
    %c0_i32 = arith.constant 0 : i32
    %c0_i32_0 = arith.constant 0 : i32
    %c0_i32_1 = arith.constant 0 : i32
    return %c0_i32, %c0_i32_0 : i32, i32
  }
  func.func @transform_2(%arg0: i32) -> (i32, i32) {
    %c0_i32 = arith.constant 0 : i32
    %c0_i32_0 = arith.constant 0 : i32
    %c0_i32_1 = arith.constant 0 : i32
    return %c0_i32, %c0_i32_0 : i32, i32
  }
  func.func @transform_3(%arg0: i32) -> (i32, i32) {
    %c0_i32 = arith.constant 0 : i32
    %c0_i32_0 = arith.constant 0 : i32
    return %c0_i32, %arg0 : i32, i32
  }
}

</mosaic_0001>

<llo_original>
// kernel: tpu_custom_call.1
$region0: #{tpu_custom_call.1}
  #allocation0 [shape = 'u32[]', space=smem, size = 0x4, offset = 0x4, fixed_abs, tag = 'smem constant byte address 0x4 - core index']
  #allocation1 [shape = 'u32[72,128]{1,0:T(1,128)}', space=vmem, size = 0x9000, scoped, tag = 'internal scratch']
  %s0 = inlined_call_operand.hbm [shape: f32[8,512], index: 0, kind: input, shape index: {}]
  %s1 = inlined_call_operand.vmem [shape: f32[8,24], index: 1, kind: input, shape index: {}]
  %s2 = inlined_call_operand.vmem [shape: f32[8,1], index: 2, kind: input, shape index: {}]
  %s3 = inlined_call_operand.hbm [shape: f32[8,512], index: 3, kind: output, shape index: {}]
  %s4 = sld [smem:[#allocation0]]
  $region49: #{tpu_custom_call.1} parent=0
    _
  %s6 = ssub.s32 1, %s4
  %s7 = scalar_select 0, %s6, %s4
  $region1: #{tpu_custom_call.1} parent=0
    #allocation2 [shape = 'u8[16384]{0}', space=vmem, size = 0x4000, scoped, tag = 'input window, operand 0']
    #allocation3 [shape = 's32[2]{0}', space=sflag, size = 0x8, scoped, tag = 'scoped memory for tpu_custom_call.1']
    #allocation4 [shape = 's32[2]{0}', space=sflag, size = 0x8, scoped, tag = 'scoped memory for tpu_custom_call.1']
    #allocation5 [shape = 'u8[16384]{0}', space=vmem, size = 0x4000, scoped, tag = 'output window, operand 0']
    %8 = vsyncpa [#allocation3], 0
    %s9 = scalar_lea.sflag [#allocation3], 1
    %10 = vsyncpa %s9, 0
    %11 = vsyncpa [#allocation4], 0
    %s12 = scalar_lea.sflag [#allocation4], 1
    %13 = vsyncpa %s12, 0
    loop: start=0, step=1, limit=4
    $region2: #{tpu_custom_call.1} parent=1 // loop_pre_header
      _
    $region3: #{tpu_custom_call.1} parent=1 // loop_header
      %s15 = sphi 0, %s19
      %p16 = scmp.ge.s32.totalorder %s15, 4
      %s25 = sphi 0, %s27
      %s28 = sphi 0, %s25
      %s29 = sphi 0, %s28
      %s45 = sphi 0, %s29
      %s49 = sphi 0, %s49
      %s51 = sphi 0, %s49
      %s52 = sphi 0, %s51
      %s66 = sphi 0, %s52
      %s70 = sphi 0, %s70
      %s72 = sphi 0, %s70
      %s73 = sphi 0, %s72
      %s87 = sphi 0, %s73
      %s93 = sphi 0, %s95
      %s96 = sphi 0, %s93
      %s97 = sphi 0, %s96
      %s113 = sphi 0, %s97
    $region4: #{tpu_custom_call.1} parent=1 // loop_header_branch
      %18 = sbr.rel (%p16) target = $region8
    $region5: #{tpu_custom_call.1} parent=1 // loop_body
      %s20 = ssub.s32 %s15, 1
      %s21 = ssub.s32 %s15, 2
      %s22 = sadd.s32 %s15, 1
      %s23 = ssub.s32 %s15, %s22
      %p24 = scmp.eq.s32.totalorder %s23, 0
      %s26 = sadd.s32 %s25, 1
      %s27 = scalar_select %p24, %s25, %s26
      %p30 = pneg %p24
      %p31 = scmp.eq.s32.totalorder %s15, 1
      %p32 = por %p30, %p31
      %p33 = scmp.ne.s32.totalorder %s25, %s28
      %p34 = scmp.eq.s32.totalorder %s15, 0
      %p35 = por %p33, %p34
      %p36 = scmp.ne.s32.totalorder %s25, %s28
      %p37 = scmp.eq.s32.totalorder %s20, 1
      %p38 = por %p36, %p37
      %p39 = scmp.ne.s32.totalorder %s28, %s29
      %p40 = scmp.eq.s32.totalorder %s20, 0
      %p41 = por %p39, %p40
      %p42 = scmp.ne.s32.totalorder %s28, %s29
      %p43 = scmp.eq.s32.totalorder %s21, 1
      %p44 = por %p42, %p43
      %p46 = scmp.ne.s32.totalorder %s29, %s45
      %p47 = scmp.eq.s32.totalorder %s21, 0
      %p48 = por %p46, %p47
      %s50 = sadd.s32 %s49, 1
      %p53 = scmp.eq.s32.totalorder %s15, 1
      %p54 = scmp.ne.s32.totalorder %s49, %s51
      %p55 = scmp.eq.s32.totalorder %s15, 0
      %p56 = por %p54, %p55
      %p57 = scmp.ne.s32.totalorder %s49, %s51
      %p58 = scmp.eq.s32.totalorder %s20, 1
      %p59 = por %p57, %p58
      %p60 = scmp.ne.s32.totalorder %s51, %s52
      %p61 = scmp.eq.s32.totalorder %s20, 0
      %p62 = por %p60, %p61
      %p63 = scmp.ne.s32.totalorder %s51, %s52
      %p64 = scmp.eq.s32.totalorder %s21, 1
      %p65 = por %p63, %p64
      %p67 = scmp.ne.s32.totalorder %s52, %s66
      %p68 = scmp.eq.s32.totalorder %s21, 0
      %p69 = por %p67, %p68
      %s71 = sadd.s32 %s70, 1
      %p74 = scmp.eq.s32.totalorder %s15, 1
      %p75 = scmp.ne.s32.totalorder %s70, %s72
      %p76 = scmp.eq.s32.totalorder %s15, 0
      %p77 = por %p75, %p76
      %p78 = scmp.ne.s32.totalorder %s70, %s72
      %p79 = scmp.eq.s32.totalorder %s20, 1
      %p80 = por %p78, %p79
      %p81 = scmp.ne.s32.totalorder %s72, %s73
      %p82 = scmp.eq.s32.totalorder %s20, 0
      %p83 = por %p81, %p82
      %p84 = scmp.ne.s32.totalorder %s72, %s73
      %p85 = scmp.eq.s32.totalorder %s21, 1
      %p86 = por %p84, %p85
      %p88 = scmp.ne.s32.totalorder %s73, %s87
      %p89 = scmp.eq.s32.totalorder %s21, 0
      %p90 = por %p88, %p89
      %s91 = ssub.s32 %s15, %s22
      %p92 = scmp.eq.s32.totalorder %s91, 0
      %s94 = sadd.s32 %s93, 1
      %s95 = scalar_select %p92, %s93, %s94
      %p98 = pneg %p92
      %p99 = scmp.eq.s32.totalorder %s15, 1
      %p100 = por %p98, %p99
      %p101 = scmp.ne.s32.totalorder %s93, %s96
      %p102 = scmp.eq.s32.totalorder %s15, 0
      %p103 = por %p101, %p102
      %p104 = scmp.ne.s32.totalorder %s93, %s96
      %p105 = scmp.eq.s32.totalorder %s20, 1
      %p106 = por %p104, %p105
      %p107 = scmp.ne.s32.totalorder %s96, %s97
      %p108 = scmp.eq.s32.totalorder %s20, 0
      %p109 = por %p107, %p108
      %p110 = scmp.ne.s32.totalorder %s96, %s97
      %p111 = scmp.eq.s32.totalorder %s21, 1
      %p112 = por %p110, %p111
      %p114 = scmp.ne.s32.totalorder %s97, %s113
      %p115 = scmp.eq.s32.totalorder %s21, 0
      %p116 = por %p114, %p115
      %p117 = scmp.le.s32.totalorder 1, %s15
      %p118 = scmp.lt.s32.totalorder %s15, 3
      %p119 = pnand %p117, %p118
      %p120 = pneg %p119
      // Predicated region
      $region9: #{tpu_custom_call.1} parent=5 // pred_check
        _
      $region10: #{tpu_custom_call.1} parent=5 // pred_check_branch
        %122 = sbr.rel (%p119) target = $region12
      $region11: #{tpu_custom_call.1} parent=5 // pred_region
        %s123 = ssub.s32 %s15, 1
        // Predicated region
        $region13: #{tpu_custom_call.1} parent=11 // pred_check
          %p124 = pneg %p62
        $region14: #{tpu_custom_call.1} parent=11 // pred_check_branch
          %126 = sbr.rel (%p124) target = $region16
        $region15: #{tpu_custom_call.1} parent=11 // pred_region
          _
        $region16: #{tpu_custom_call.1} parent=11 // pred_fallthru
          _
        // Predicated region
        $region17: #{tpu_custom_call.1} parent=11 // pred_check
          %p127 = pneg %p83
        $region18: #{tpu_custom_call.1} parent=11 // pred_check_branch
          %129 = sbr.rel (%p127) target = $region20
        $region19: #{tpu_custom_call.1} parent=11 // pred_region
          _
        $region20: #{tpu_custom_call.1} parent=11 // pred_fallthru
          _
      $region12: #{tpu_custom_call.1} parent=5 // pred_fallthru
        _
      %p130 = scmp.lt.s32.totalorder %s15, 2
      // Predicated region
      $region21: #{tpu_custom_call.1} parent=5 // pred_check
        %p131 = pneg %p130
      $region22: #{tpu_custom_call.1} parent=5 // pred_check_branch
        %133 = sbr.rel (%p131) target = $region24
      $region23: #{tpu_custom_call.1} parent=5 // pred_region
        // Predicated region
        $region25: #{tpu_custom_call.1} parent=23 // pred_check
          %p134 = pneg %p35
        $region26: #{tpu_custom_call.1} parent=23 // pred_check_branch
          %136 = sbr.rel (%p134) target = $region28
        $region27: #{tpu_custom_call.1} parent=23 // pred_region
          %s137 = sand.u32 %s25, 1
          %s138 = scalar_lea.sflag [#allocation3], %s137
          %s139 = sand.u32 %s25, 1
          %s140 = smul.addr %s139, 16
          %s141 = scalar_lea.vmem [#allocation2], %s140
          %s142 = smul.u32 2, %s15
          %144 = vsyncadd %s138, 0
          %s145 = smul.addr %s142, 8
          %s146 = scalar_lea.hbm %s0, %s145
          %s148 = sshll.u32 %s146, 4
          %s149 = int_to_ptr.hbm [resolvable:$true] %s148
          %s150 = sshll.u32 %s141, 4
          %s151 = int_to_ptr.vmem [resolvable:$true] %s150
          %153 = dma.hbm_to_vmem [thread:$0]  %s149, 256, %s151, %s138
        $region28: #{tpu_custom_call.1} parent=23 // pred_fallthru
          _
      $region24: #{tpu_custom_call.1} parent=5 // pred_fallthru
        _
      %p154 = scmp.le.s32.totalorder 1, %s15
      %p155 = scmp.lt.s32.totalorder %s15, 3
      %p156 = pnand %p154, %p155
      %p157 = pneg %p156
      // Predicated region
      $region29: #{tpu_custom_call.1} parent=5 // pred_check
        _
      $region30: #{tpu_custom_call.1} parent=5 // pred_check_branch
        %159 = sbr.rel (%p156) target = $region32
      $region31: #{tpu_custom_call.1} parent=5 // pred_region
        %s160 = ssub.s32 %s15, 1
        %s161 = sand.u32 %s28, 1
        %s162 = scalar_lea.sflag [#allocation3], %s161
        %s163 = sand.u32 %s28, 1
        %s164 = smul.addr %s163, 16
        %s165 = scalar_lea.vmem [#allocation2], %s164
        // Predicated region
        $region33: #{tpu_custom_call.1} parent=31 // pred_check
          %p166 = pneg %p41
        $region34: #{tpu_custom_call.1} parent=31 // pred_check_branch
          %168 = sbr.rel (%p166) target = $region36
        $region35: #{tpu_custom_call.1} parent=31 // pred_region
          %170 = dma.done %s162, 256
        $region36: #{tpu_custom_call.1} parent=31 // pred_fallthru
          _
        %s171 = sand.u32 %s28, 1
        %s172 = scalar_lea.sflag [#allocation3], %s171
        %s173 = sand.u32 %s28, 1
        %s174 = smul.addr %s173, 16
        %s175 = scalar_lea.vmem [#allocation2], %s174
        %p176 = pneg %p41
        %p177 = pneg %p38
        %p178 = pneg %p62
        %p179 = pneg %p59
        %p180 = pneg %p83
        %p181 = pneg %p80
        %p182 = pneg %p109
        %p183 = pneg %p106
        %s184 = sand.u32 %s96, 1
        %s185 = scalar_lea.sflag [#allocation4], %s184
        %s186 = sand.u32 %s96, 1
        %s187 = smul.addr %s186, 16
        %s188 = scalar_lea.vmem [#allocation5], %s187
        %s189 = smul.u32 2, %s20
        %s190 = smul.u32 2, %s20
        %v191 = vld [vmem:[%s165] sm:$0xff]
        %v192 = vld [vmem:[%s165 + $0x8] sm:$0xff]
        %193 = vrot.lane.b32.xlu0 %v191, 127
        %v194 = vpop.permute.xlu0 %193
        %195 = vrot.lane.b32.xlu0 %v192, 127
        %v196 = vpop.permute.xlu0 %195
        %v197 = vlaneseq
        %v198 = vand.u32 %v197, 127
        %vm199 = vcmp.lt.s32.totalorder %v198, 127
        %v200 = vsel %vm199, %v194, %v196
        %v201 = vsel %vm199, %v196, %v194
        %202 = vrot.lane.b32.xlu0 %v191, 126
        %v203 = vpop.permute.xlu0 %202
        %204 = vrot.lane.b32.xlu0 %v192, 126
        %v205 = vpop.permute.xlu0 %204
        %vm206 = vcmp.lt.s32.totalorder %v198, 126
        %v207 = vsel %vm206, %v203, %v205
        %v208 = vsel %vm206, %v205, %v203
        %v209 = vld [vmem:[%s1] sm:$0xff]
        %v210 = vld [vmem:[%s2] sm:$0xff]
        %212 = vset.pattern.permute.xlu0 0
        %213 = vperm.xlu0 %212, %v210
        %v214 = vpop.permute.xlu0 %213
        %vm216 = vcmask 195584
        %v218 = vsel %vm216, %v209, 0
        %220 = vmatpush.msra.mxu0 0.0
        %221 = vmatpush.msra.mxu0 0.0
        %222 = vmatpush.msra.mxu0 0.0
        %223 = vmatpush.msra.mxu0 0.0
        %224 = vmatpush.msra.mxu0 0.0
        %225 = vmatpush.msra.mxu0 0.0
        %226 = vmatpush.msra.mxu0 0.0
        %227 = vmatpush.msra.mxu0 0.0
        %228 = vmatpush.msra.mxu0 0.0
        %229 = vmatpush.msra.mxu0 0.0
        %230 = vmatpush.msra.mxu0 0.0
        %231 = vmatpush.msra.mxu0 0.0
        %232 = vmatpush.msra.mxu0 0.0
        %233 = vmatpush.msra.mxu0 %v207
        %234 = vmatpush.msra.mxu0 %v200
        %235 = vmatpush.msra.mxu0 %v191
        %236 = vmatmul.f32.gmra.mxu0 %v218
        %v237 = vpop.f32.mrf.mxu0
        %v238 = vadd.f32 %v214, %v237
        %239 = vdwg.mxu0
        %240 = vmatpush.msra.mxu0 0.0
        %241 = vmatpush.msra.mxu0 0.0
        %242 = vmatpush.msra.mxu0 0.0
        %243 = vmatpush.msra.mxu0 0.0
        %244 = vmatpush.msra.mxu0 0.0
        %245 = vmatpush.msra.mxu0 0.0
        %246 = vmatpush.msra.mxu0 0.0
        %247 = vmatpush.msra.mxu0 0.0
        %248 = vmatpush.msra.mxu0 0.0
        %249 = vmatpush.msra.mxu0 0.0
        %250 = vmatpush.msra.mxu0 0.0
        %251 = vmatpush.msra.mxu0 0.0
        %252 = vmatpush.msra.mxu0 0.0
        %253 = vmatpush.msra.mxu0 %v208
        %254 = vmatpush.msra.mxu0 %v201
        %255 = vmatpush.msra.mxu0 %v192
        %256 = vmatmul.f32.gmra.mxu0 %v218
        %v257 = vpop.f32.mrf.mxu0
        %v258 = vadd.f32 %v214, %v257
        %259 = vdwg.mxu0
        %260 = vst [vmem:[%s188] sm:$0xff] %v238
        %261 = vst [vmem:[%s188 + $0x8] sm:$0xff] %v258
        %s262 = sand.u32 %s96, 1
        %s263 = scalar_lea.sflag [#allocation4], %s262
        %s264 = sand.u32 %s96, 1
        %s265 = smul.addr %s264, 16
        %s266 = scalar_lea.vmem [#allocation5], %s265
        // Predicated region
        $region37: #{tpu_custom_call.1} parent=31 // pred_check
          %p267 = pneg %p106
        $region38: #{tpu_custom_call.1} parent=31 // pred_check_branch
          %269 = sbr.rel (%p267) target = $region40
        $region39: #{tpu_custom_call.1} parent=31 // pred_region
          %s270 = smul.u32 2, %s20
          %272 = vsyncadd %s263, 0
          %s273 = smul.addr %s270, 8
          %s274 = scalar_lea.hbm %s3, %s273
          %s276 = sshll.u32 %s266, 4
          %s277 = int_to_ptr.vmem [resolvable:$true] %s276
          %s278 = sshll.u32 %s274, 4
          %s279 = int_to_ptr.hbm [resolvable:$true] %s278
          %281 = dma.vmem_to_hbm [thread:$0]  %s277, 256, %s279, %s263
        $region40: #{tpu_custom_call.1} parent=31 // pred_fallthru
          _
      $region32: #{tpu_custom_call.1} parent=5 // pred_fallthru
        _
      %p282 = scmp.le.s32.totalorder 2, %s15
      // Predicated region
      $region41: #{tpu_custom_call.1} parent=5 // pred_check
        %p283 = pneg %p282
      $region42: #{tpu_custom_call.1} parent=5 // pred_check_branch
        %285 = sbr.rel (%p283) target = $region44
      $region43: #{tpu_custom_call.1} parent=5 // pred_region
        %s286 = ssub.s32 %s15, 2
        // Predicated region
        $region45: #{tpu_custom_call.1} parent=43 // pred_check
          %p287 = pneg %p112
        $region46: #{tpu_custom_call.1} parent=43 // pred_check_branch
          %289 = sbr.rel (%p287) target = $region48
        $region47: #{tpu_custom_call.1} parent=43 // pred_region
          %s290 = sand.u32 %s97, 1
          %s291 = scalar_lea.sflag [#allocation4], %s290
          %s292 = sand.u32 %s97, 1
          %s293 = smul.addr %s292, 16
          %s294 = scalar_lea.vmem [#allocation5], %s293
          %296 = dma.done %s291, 256
        $region48: #{tpu_custom_call.1} parent=43 // pred_fallthru
          _
      $region44: #{tpu_custom_call.1} parent=5 // pred_fallthru
        _
    $region6: #{tpu_custom_call.1} parent=1 // loop_footer
      %s19 = sadd.s32 1, %s15
    $region7: #{tpu_custom_call.1} parent=1 // loop_footer_branch
      %14 = sbr.rel target = $region3
    $region8: #{tpu_custom_call.1} parent=1 // loop_exit
      _
    %297 = vsyncpa [#allocation3], 1
    %s298 = scalar_lea.sflag [#allocation3], 1
    %299 = vsyncpa %s298, 1
    %300 = vsyncpa [#allocation4], 1
    %s301 = scalar_lea.sflag [#allocation4], 1
    %302 = vsyncpa %s301, 1

</llo_original>
